<compile_context>
chip_gen: v5e
topology: v5e:2x2
jax: 0.10.0
libtpu: 0.0.40
codegen_flags: <defaults>
</compile_context>

<pallas_src>
import functools

import jax
import jax.numpy as jnp
from jax.experimental import pallas as pl
from jax.experimental.pallas import tpu as pltpu


def _scale_norm_kernel(g_ref, x_ref, o_ref, *, dim, eps):
    # g_ref: (1,) scalar parameter in SMEM.
    # x_ref / o_ref: (tile_rows, dim) blocks in VMEM.
    x32 = x_ref[...].astype(jnp.float32)
    sq_sum = jnp.sum(x32 * x32, axis=-1, keepdims=True)        # (tile_rows, 1) f32
    # 1 / max(sqrt(sq_sum)*dim^-0.5, eps) == min(rsqrt(sq_sum)*sqrt(dim), 1/eps).
    # Exact rsqrt (EUP slot); rsqrt(0)=inf is clamped by the min, matching
    # clamp(min=eps) for an all-zero row (output 0).
    inv_norm = jnp.minimum(jax.lax.rsqrt(sq_sum) * (float(dim) ** 0.5),
                           jnp.float32(1.0 / eps))
    row_scale = inv_norm * g_ref[0].astype(jnp.float32)        # fold g into per-row scale
    # Re-read x from VMEM for the output pass instead of holding the f32 upcast
    # live across the reduction (frees a block-sized f32 temp).
    o_ref[...] = (x_ref[...].astype(jnp.float32) * row_scale).astype(o_ref.dtype)


def _round_up(a, m):
    return ((a + m - 1) // m) * m


def scale_norm(x, g, *, eps=1e-5, tile_rows=None):
    """ScaleNorm forward. x: (..., dim) f32/bf16 array; g: shape-(1,) scalar param."""
    orig_shape = x.shape
    dim = orig_shape[-1]
    rows = 1
    for s in orig_shape[:-1]:
        rows *= s
    x2d = x.reshape(rows, dim)
    itemsize = jnp.dtype(x.dtype).itemsize

    # Dtype-aware sublane alignment: bf16 packs 2 rows / sublane, int8/fp8 pack 4.
    sub = {4: 8, 2: 16, 1: 32}.get(itemsize, 8)

    # Physical VMEM per TensorCore: v7x = 64 MiB, v5e/v6e = 128 MiB.
    try:
        vmem_phys = int(pltpu.get_tpu_info().vmem_capacity_bytes)
    except Exception:  # API drift / off-TPU tracing -> assume the smallest (v7x)
        vmem_phys = 64 << 20
    vmem_phys = max(32 << 20, min(vmem_phys, 128 << 20))

    # VMEM accounting per step: in + out double-buffered (4 * block bytes) plus
    # one block-sized f32 working copy inside the kernel (conservative).
    pipeline_budget = min((vmem_phys * 3) // 4, 64 << 20)
    vmem_limit = max(min((vmem_phys * 7) // 8, 112 << 20), 28 << 20)

    if tile_rows is None:
        per_row_bytes = 4 * dim * itemsize + 4 * dim
        budget_rows = max(sub, (pipeline_budget // per_row_bytes) // sub * sub)
        # Prefer >= ~4 grid steps when the problem is big enough: keeps the DMA
        # pipeline overlapped and lets v7x shard row tiles across its 2 TCs.
        min_step_rows = _round_up(pl.cdiv(rows, 4), sub)
        tile_rows = min(budget_rows, min_step_rows)

    tile_rows = min(tile_rows, rows)
    if tile_rows != rows:
        # Block rows must be a multiple of the sublane pack or the full extent.
        tile_rows = min(rows, max(sub, (tile_rows // sub) * sub))

    grid = (pl.cdiv(rows, tile_rows),)
    kernel = functools.partial(_scale_norm_kernel, dim=dim, eps=eps)

    cost = pl.CostEstimate(
        flops=3 * rows * dim,
        transcendentals=rows,
        bytes_accessed=2 * rows * dim * itemsize + jnp.dtype(g.dtype).itemsize,
    )

    out = pl.pallas_call(
        kernel,
        out_shape=jax.ShapeDtypeStruct((rows, dim), x.dtype),
        grid=grid,
        in_specs=[
            pl.BlockSpec(memory_space=pltpu.MemorySpace.SMEM),   # g: scalar in SMEM
            pl.BlockSpec((tile_rows, dim), lambda i: (i, 0)),    # x row-tile
        ],
        out_specs=pl.BlockSpec((tile_rows, dim), lambda i: (i, 0)),
        compiler_params=pltpu.CompilerParams(
            dimension_semantics=("parallel",),   # independent row tiles (v7x megacore)
            vmem_limit_bytes=int(vmem_limit),    # v5e scoped default is only 16 MiB
        ),
        cost_estimate=cost,
    )(g, x2d)

    return out.reshape(orig_shape)


if __name__ == "__main__":
    key = jax.random.PRNGKey(0)
    batch, seq, dim = 2, 8, 32
    x = jax.random.normal(key, (batch, seq, dim), dtype=jnp.float32)

    # Parameter init matches nn.Parameter(torch.ones(1)).
    g = jnp.ones((1,), dtype=jnp.float32)
    eps = 1e-5

    def ref_scale_norm(xv, gv, epsv):
        scale = xv.shape[-1] ** -0.5
        x32 = xv.astype(jnp.float32)
        norm = jnp.linalg.norm(x32, axis=-1, keepdims=True) * scale
        return (x32 / jnp.maximum(norm, epsv) * gv[0]).astype(xv.dtype)

    # f32 path
    out = jax.block_until_ready(scale_norm(x, g, eps=eps))
    ref = ref_scale_norm(x, g, eps)
    assert out.shape == x.shape
    assert jnp.allclose(out, ref, atol=1e-5, rtol=1e-5), "f32 mismatch vs reference"

    # bf16 path (exercises the dtype-aware tiling branch).
    x_bf = x.astype(jnp.bfloat16)
    out_bf = jax.block_until_ready(scale_norm(x_bf, g, eps=eps))
    ref_bf = ref_scale_norm(x_bf, g, eps)
    assert out_bf.shape == x_bf.shape
    assert jnp.allclose(out_bf.astype(jnp.float32), ref_bf.astype(jnp.float32),
                        atol=2e-2, rtol=2e-2), "bf16 mismatch vs reference"

    print("KERNEL_OK")
</pallas_src>

<mosaic_0001>
module attributes {stable_mosaic.version = 11 : i64} {
  func.func @_scale_norm_kernel(%arg0: i32, %arg1: memref<1xf32, #tpu.memory_space<smem>>, %arg2: memref<8x32xf32, #tpu.memory_space<vmem>>, %arg3: memref<8x32xf32, #tpu.memory_space<vmem>>) attributes {dimension_semantics = [#tpu.dimension_semantics<parallel>], iteration_bounds = array<i64: 2>, scalar_prefetch = 0 : i64, scratch_operands = 0 : i64, tpu.core_type = #tpu.core_type<tc>, window_params = [{transform_indices = @transform_0, window_bounds = array<i64: 1>}, {transform_indices = @transform_1, window_bounds = array<i64: 8, 32>}, {transform_indices = @transform_2, window_bounds = array<i64: 8, 32>}]} {
    %c0 = arith.constant 0 : index
    %c0_0 = arith.constant 0 : index
    %0 = vector.load %arg2[%c0, %c0_0] : memref<8x32xf32, #tpu.memory_space<vmem>>, vector<8x32xf32>
    %1 = arith.mulf %0, %0 : vector<8x32xf32>
    %cst = arith.constant dense<0.000000e+00> : vector<8xf32>
    %2 = vector.multi_reduction <add>, %1, %cst [1] : vector<8x32xf32> to vector<8xf32>
    %3 = vector.shape_cast %2 : vector<8xf32> to vector<8x1xf32>
    %4 = math.rsqrt %3 : vector<8x1xf32>
    %cst_1 = arith.constant 5.65685415 : f32
    %5 = vector.broadcast %cst_1 : f32 to vector<8x1xf32>
    %6 = arith.mulf %4, %5 : vector<8x1xf32>
    %cst_2 = arith.constant 1.000000e+05 : f32
    %7 = vector.broadcast %cst_2 : f32 to vector<8x1xf32>
    %8 = arith.minimumf %6, %7 : vector<8x1xf32>
    %c0_3 = arith.constant 0 : index
    %9 = memref.load %arg1[%c0_3] : memref<1xf32, #tpu.memory_space<smem>>
    %10 = vector.broadcast %9 : f32 to vector<8x1xf32>
    %11 = arith.mulf %8, %10 : vector<8x1xf32>
    %c0_4 = arith.constant 0 : index
    %c0_5 = arith.constant 0 : index
    %12 = vector.load %arg2[%c0_4, %c0_5] : memref<8x32xf32, #tpu.memory_space<vmem>>, vector<8x32xf32>
    %13 = vector.broadcast %11 : vector<8x1xf32> to vector<8x32xf32>
    %14 = arith.mulf %12, %13 : vector<8x32xf32>
    %c0_6 = arith.constant 0 : index
    %c0_7 = arith.constant 0 : index
    %15 = vector.load %arg3[%c0_6, %c0_7] : memref<8x32xf32, #tpu.memory_space<vmem>>, vector<8x32xf32>
    tpu.vector_store %arg3[%c0_6, %c0_7], %14 {strides = array<i32>} : memref<8x32xf32, #tpu.memory_space<vmem>>, vector<8x32xf32>,
    return
  }
  func.func @transform_0(%arg0: i32) -> i32 {
    %c0_i32 = arith.constant 0 : i32
    %c0_i32_0 = arith.constant 0 : i32
    return %c0_i32 : i32
  }
  func.func @transform_1(%arg0: i32) -> (i32, i32) {
    %c0_i32 = arith.constant 0 : i32
    %c0_i32_0 = arith.constant 0 : i32
    return %arg0, %c0_i32 : i32, i32
  }
  func.func @transform_2(%arg0: i32) -> (i32, i32) {
    %c0_i32 = arith.constant 0 : i32
    %c0_i32_0 = arith.constant 0 : i32
    return %arg0, %c0_i32 : i32, i32
  }
}

</mosaic_0001>

<llo_original>
// kernel: tpu_custom_call.1
$region0: #{tpu_custom_call.1}
  #allocation0 [shape = 'u32[]', space=smem, size = 0x4, offset = 0x4, fixed_abs, tag = 'smem constant byte address 0x4 - core index']
  #allocation1 [shape = 'u32[72,128]{1,0:T(1,128)}', space=vmem, size = 0x9000, scoped, tag = 'internal scratch']
  #allocation2 [shape = 'f32[1]{0:T(128)S(6)}', space=smem, size = 0x200, scoped, tag = 'scoped memory for tpu_custom_call.1']
  %s0 = inlined_call_operand.<no memory space> [shape: f32[1], index: 0, kind: input, shape index: {}]
  %s1 = inlined_call_operand.hbm [shape: f32[16,32], index: 1, kind: input, shape index: {}]
  %s2 = inlined_call_operand.hbm [shape: f32[16,32], index: 2, kind: output, shape index: {}]
  %s3 = sld [smem:[#allocation0]]
  $region45: #{tpu_custom_call.1} parent=0
    _
  %s5 = ssub.s32 1, %s3
  %s6 = scalar_select 0, %s5, %s3
  %7 = sst [smem:[#allocation2]] %s0
  $region1: #{tpu_custom_call.1} parent=0
    #allocation3 [shape = 'u8[8192]{0}', space=vmem, size = 0x2000, scoped, tag = 'input window, operand 1']
    #allocation4 [shape = 's32[2]{0}', space=sflag, size = 0x8, scoped, tag = 'scoped memory for tpu_custom_call.1']
    #allocation5 [shape = 's32[2]{0}', space=sflag, size = 0x8, scoped, tag = 'scoped memory for tpu_custom_call.1']
    #allocation6 [shape = 'u8[8192]{0}', space=vmem, size = 0x2000, scoped, tag = 'output window, operand 0']
    %8 = vsyncpa [#allocation4], 0
    %s9 = scalar_lea.sflag [#allocation4], 1
    %10 = vsyncpa %s9, 0
    %11 = vsyncpa [#allocation5], 0
    %s12 = scalar_lea.sflag [#allocation5], 1
    %13 = vsyncpa %s12, 0
    loop: start=0, step=1, limit=4
    $region2: #{tpu_custom_call.1} parent=1 // loop_pre_header
      _
    $region3: #{tpu_custom_call.1} parent=1 // loop_header
      %s15 = sphi 0, %s19
      %p16 = scmp.ge.s32.totalorder %s15, 4
      %s23 = sphi 0, %s23
      %s25 = sphi 0, %s23
      %s26 = sphi 0, %s25
      %s40 = sphi 0, %s26
      %s46 = sphi 0, %s48
      %s49 = sphi 0, %s46
      %s50 = sphi 0, %s49
      %s66 = sphi 0, %s50
      %s72 = sphi 0, %s74
      %s75 = sphi 0, %s72
      %s76 = sphi 0, %s75
      %s92 = sphi 0, %s76
    $region4: #{tpu_custom_call.1} parent=1 // loop_header_branch
      %18 = sbr.rel (%p16) target = $region8
    $region5: #{tpu_custom_call.1} parent=1 // loop_body
      %s20 = ssub.s32 %s15, 1
      %s21 = ssub.s32 %s15, 2
      %s22 = sadd.s32 %s15, 1
      %s24 = sadd.s32 %s23, 1
      %p27 = scmp.eq.s32.totalorder %s15, 1
      %p28 = scmp.ne.s32.totalorder %s23, %s25
      %p29 = scmp.eq.s32.totalorder %s15, 0
      %p30 = por %p28, %p29
      %p31 = scmp.ne.s32.totalorder %s23, %s25
      %p32 = scmp.eq.s32.totalorder %s20, 1
      %p33 = por %p31, %p32
      %p34 = scmp.ne.s32.totalorder %s25, %s26
      %p35 = scmp.eq.s32.totalorder %s20, 0
      %p36 = por %p34, %p35
      %p37 = scmp.ne.s32.totalorder %s25, %s26
      %p38 = scmp.eq.s32.totalorder %s21, 1
      %p39 = por %p37, %p38
      %p41 = scmp.ne.s32.totalorder %s26, %s40
      %p42 = scmp.eq.s32.totalorder %s21, 0
      %p43 = por %p41, %p42
      %s44 = ssub.s32 %s15, %s22
      %p45 = scmp.eq.s32.totalorder %s44, 0
      %s47 = sadd.s32 %s46, 1
      %s48 = scalar_select %p45, %s46, %s47
      %p51 = pneg %p45
      %p52 = scmp.eq.s32.totalorder %s15, 1
      %p53 = por %p51, %p52
      %p54 = scmp.ne.s32.totalorder %s46, %s49
      %p55 = scmp.eq.s32.totalorder %s15, 0
      %p56 = por %p54, %p55
      %p57 = scmp.ne.s32.totalorder %s46, %s49
      %p58 = scmp.eq.s32.totalorder %s20, 1
      %p59 = por %p57, %p58
      %p60 = scmp.ne.s32.totalorder %s49, %s50
      %p61 = scmp.eq.s32.totalorder %s20, 0
      %p62 = por %p60, %p61
      %p63 = scmp.ne.s32.totalorder %s49, %s50
      %p64 = scmp.eq.s32.totalorder %s21, 1
      %p65 = por %p63, %p64
      %p67 = scmp.ne.s32.totalorder %s50, %s66
      %p68 = scmp.eq.s32.totalorder %s21, 0
      %p69 = por %p67, %p68
      %s70 = ssub.s32 %s15, %s22
      %p71 = scmp.eq.s32.totalorder %s70, 0
      %s73 = sadd.s32 %s72, 1
      %s74 = scalar_select %p71, %s72, %s73
      %p77 = pneg %p71
      %p78 = scmp.eq.s32.totalorder %s15, 1
      %p79 = por %p77, %p78
      %p80 = scmp.ne.s32.totalorder %s72, %s75
      %p81 = scmp.eq.s32.totalorder %s15, 0
      %p82 = por %p80, %p81
      %p83 = scmp.ne.s32.totalorder %s72, %s75
      %p84 = scmp.eq.s32.totalorder %s20, 1
      %p85 = por %p83, %p84
      %p86 = scmp.ne.s32.totalorder %s75, %s76
      %p87 = scmp.eq.s32.totalorder %s20, 0
      %p88 = por %p86, %p87
      %p89 = scmp.ne.s32.totalorder %s75, %s76
      %p90 = scmp.eq.s32.totalorder %s21, 1
      %p91 = por %p89, %p90
      %p93 = scmp.ne.s32.totalorder %s76, %s92
      %p94 = scmp.eq.s32.totalorder %s21, 0
      %p95 = por %p93, %p94
      %p96 = scmp.le.s32.totalorder 1, %s15
      %p97 = scmp.lt.s32.totalorder %s15, 3
      %p98 = pnand %p96, %p97
      %p99 = pneg %p98
      // Predicated region
      $region9: #{tpu_custom_call.1} parent=5 // pred_check
        _
      $region10: #{tpu_custom_call.1} parent=5 // pred_check_branch
        %101 = sbr.rel (%p98) target = $region12
      $region11: #{tpu_custom_call.1} parent=5 // pred_region
        %s102 = ssub.s32 %s15, 1
        // Predicated region
        $region13: #{tpu_custom_call.1} parent=11 // pred_check
          %p103 = pneg %p36
        $region14: #{tpu_custom_call.1} parent=11 // pred_check_branch
          %105 = sbr.rel (%p103) target = $region16
        $region15: #{tpu_custom_call.1} parent=11 // pred_region
          _
        $region16: #{tpu_custom_call.1} parent=11 // pred_fallthru
          _
      $region12: #{tpu_custom_call.1} parent=5 // pred_fallthru
        _
      %p106 = scmp.lt.s32.totalorder %s15, 2
      // Predicated region
      $region17: #{tpu_custom_call.1} parent=5 // pred_check
        %p107 = pneg %p106
      $region18: #{tpu_custom_call.1} parent=5 // pred_check_branch
        %109 = sbr.rel (%p107) target = $region20
      $region19: #{tpu_custom_call.1} parent=5 // pred_region
        // Predicated region
        $region21: #{tpu_custom_call.1} parent=19 // pred_check
          %p110 = pneg %p56
        $region22: #{tpu_custom_call.1} parent=19 // pred_check_branch
          %112 = sbr.rel (%p110) target = $region24
        $region23: #{tpu_custom_call.1} parent=19 // pred_region
          %s113 = sand.u32 %s46, 1
          %s114 = scalar_lea.sflag [#allocation4], %s113
          %s115 = sand.u32 %s46, 1
          %s116 = smul.addr %s115, 8
          %s117 = scalar_lea.vmem [#allocation3], %s116
          %119 = vsyncadd %s114, 0
          %s120 = smul.addr %s15, 8
          %s121 = scalar_lea.hbm %s1, %s120
          %s123 = sshll.u32 %s121, 4
          %s124 = int_to_ptr.hbm [resolvable:$true] %s123
          %s125 = sshll.u32 %s117, 4
          %s126 = int_to_ptr.vmem [resolvable:$true] %s125
          %128 = dma.hbm_to_vmem [thread:$0]  %s124, 128, %s126, %s114
        $region24: #{tpu_custom_call.1} parent=19 // pred_fallthru
          _
      $region20: #{tpu_custom_call.1} parent=5 // pred_fallthru
        _
      %p129 = scmp.le.s32.totalorder 1, %s15
      %p130 = scmp.lt.s32.totalorder %s15, 3
      %p131 = pnand %p129, %p130
      %p132 = pneg %p131
      // Predicated region
      $region25: #{tpu_custom_call.1} parent=5 // pred_check
        _
      $region26: #{tpu_custom_call.1} parent=5 // pred_check_branch
        %134 = sbr.rel (%p131) target = $region28
      $region27: #{tpu_custom_call.1} parent=5 // pred_region
        %s135 = ssub.s32 %s15, 1
        %s136 = sand.u32 %s49, 1
        %s137 = scalar_lea.sflag [#allocation4], %s136
        %s138 = sand.u32 %s49, 1
        %s139 = smul.addr %s138, 8
        %s140 = scalar_lea.vmem [#allocation3], %s139
        // Predicated region
        $region29: #{tpu_custom_call.1} parent=27 // pred_check
          %p141 = pneg %p62
        $region30: #{tpu_custom_call.1} parent=27 // pred_check_branch
          %143 = sbr.rel (%p141) target = $region32
        $region31: #{tpu_custom_call.1} parent=27 // pred_region
          %145 = dma.done %s137, 128
        $region32: #{tpu_custom_call.1} parent=27 // pred_fallthru
          _
        %p146 = pneg %p36
        %p147 = pneg %p33
        %s148 = sand.u32 %s49, 1
        %s149 = scalar_lea.sflag [#allocation4], %s148
        %s150 = sand.u32 %s49, 1
        %s151 = smul.addr %s150, 8
        %s152 = scalar_lea.vmem [#allocation3], %s151
        %p153 = pneg %p62
        %p154 = pneg %p59
        %p155 = pneg %p88
        %p156 = pneg %p85
        %s157 = sand.u32 %s75, 1
        %s158 = scalar_lea.sflag [#allocation5], %s157
        %s159 = sand.u32 %s75, 1
        %s160 = smul.addr %s159, 8
        %s161 = scalar_lea.vmem [#allocation6], %s160
        %v162 = vld [vmem:[%s140] sm:$0xff]
        %v163 = vmul.f32 %v162, %v162
        %vm164 = vcmask 261120
        %v165 = vsel %vm164, %v163, 0.0
        %166 = vadd.xlane.f32.xlu0 %v165
        %v167 = vpop.xlane.xlu0 %166
        %v168 = vrsqrt.pop %v167
        %v169 = vmul.f32 %v168, %v167
        %v170 = vmul.f32 %v169, %v168
        %v171 = vmul.f32 0.5, %v170
        %v172 = vsub.f32 1.5, %v171
        %v173 = vmul.f32 %v168, %v172
        %vm174 = vweird.f32 %v167
        %vm175 = vweird.f32 %v168
        %vm176 = vmor %vm174, %vm175
        %v177 = vsel %vm176, %v168, %v173
        %v178 = vmul.f32 %v177, 5.656854
        %v179 = vmin.f32 %v178, 100000.0
        %s180 = sld [smem:[#allocation2]]
        %v181 = vstv %s180
        %v182 = vmul.f32 %v179, %v181
        %v183 = vmul.f32 %v162, %v182
        %184 = vst.msk [vmem:[%s161] sm:$0xff] %vm164, %v183
        %s185 = sand.u32 %s75, 1
        %s186 = scalar_lea.sflag [#allocation5], %s185
        %s187 = sand.u32 %s75, 1
        %s188 = smul.addr %s187, 8
        %s189 = scalar_lea.vmem [#allocation6], %s188
        // Predicated region
        $region33: #{tpu_custom_call.1} parent=27 // pred_check
          %p190 = pneg %p85
        $region34: #{tpu_custom_call.1} parent=27 // pred_check_branch
          %192 = sbr.rel (%p190) target = $region36
        $region35: #{tpu_custom_call.1} parent=27 // pred_region
          %194 = vsyncadd %s186, 0
          %s195 = smul.addr %s20, 8
          %s196 = scalar_lea.hbm %s2, %s195
          %s198 = sshll.u32 %s189, 4
          %s199 = int_to_ptr.vmem [resolvable:$true] %s198
          %s200 = sshll.u32 %s196, 4
          %s201 = int_to_ptr.hbm [resolvable:$true] %s200
          %203 = dma.vmem_to_hbm [thread:$0]  %s199, 128, %s201, %s186
        $region36: #{tpu_custom_call.1} parent=27 // pred_fallthru
          _
      $region28: #{tpu_custom_call.1} parent=5 // pred_fallthru
        _
      %p204 = scmp.le.s32.totalorder 2, %s15
      // Predicated region
      $region37: #{tpu_custom_call.1} parent=5 // pred_check
        %p205 = pneg %p204
      $region38: #{tpu_custom_call.1} parent=5 // pred_check_branch
        %207 = sbr.rel (%p205) target = $region40
      $region39: #{tpu_custom_call.1} parent=5 // pred_region
        %s208 = ssub.s32 %s15, 2
        // Predicated region
        $region41: #{tpu_custom_call.1} parent=39 // pred_check
          %p209 = pneg %p91
        $region42: #{tpu_custom_call.1} parent=39 // pred_check_branch
          %211 = sbr.rel (%p209) target = $region44
        $region43: #{tpu_custom_call.1} parent=39 // pred_region
          %s212 = sand.u32 %s76, 1
          %s213 = scalar_lea.sflag [#allocation5], %s212
          %s214 = sand.u32 %s76, 1
          %s215 = smul.addr %s214, 8
          %s216 = scalar_lea.vmem [#allocation6], %s215
          %218 = dma.done %s213, 128
        $region44: #{tpu_custom_call.1} parent=39 // pred_fallthru
          _
      $region40: #{tpu_custom_call.1} parent=5 // pred_fallthru
        _
    $region6: #{tpu_custom_call.1} parent=1 // loop_footer
      %s19 = sadd.s32 1, %s15
    $region7: #{tpu_custom_call.1} parent=1 // loop_footer_branch
      %14 = sbr.rel target = $region3
    $region8: #{tpu_custom_call.1} parent=1 // loop_exit
      _
    %219 = vsyncpa [#allocation4], 1
    %s220 = scalar_lea.sflag [#allocation4], 1
    %221 = vsyncpa %s220, 1
    %222 = vsyncpa [#allocation5], 1
    %s223 = scalar_lea.sflag [#allocation5], 1
    %224 = vsyncpa %s223, 1

</llo_original>
